<compile_context>
chip_gen: v5e
topology: v5e:2x2
jax: 0.10.0
libtpu: 0.0.40
codegen_flags: <defaults>
</compile_context>

<pallas_src>
import functools

import jax
import jax.numpy as jnp
from jax.experimental import pallas as pl
from jax.experimental.pallas import tpu as pltpu


def _relu6(x):
    return jnp.clip(x, 0.0, 6.0)


def inverted_residual_kernel(x_ref, w1_ref, b1_ref, dwk_ref, b2_ref,
                             w3_ref, b3_ref, out_ref, *, H, W,
                             use_res_connect):
    """One grid step = one image, channel-major (C, H*W) layout in VMEM."""
    S = H * W
    x = x_ref[0]                                   # (Cin, S)

    # ---- 1x1 expand conv (BN scale folded into w1) + bias + ReLU6 ----
    h = jnp.dot(w1_ref[...], x, preferred_element_type=jnp.float32)
    h = _relu6(h + b1_ref[...])                    # (hidden, S)

    # ---- 3x3 depthwise conv, stride=1, pad=1 (BN scale folded into taps) ----
    # 9 taps = pltpu.roll along the flattened spatial axis + boundary masks.
    pos = jax.lax.broadcasted_iota(jnp.int32, (1, S), 1)
    col = pos % W
    not_top = pos >= W                  # row y-1 exists
    not_bot = pos < (H - 1) * W         # row y+1 exists
    not_left = col != 0                 # col x-1 exists
    not_right = col != (W - 1)          # col x+1 exists

    acc = h * dwk_ref[1, 1]             # center tap, always valid
    for dh in range(3):
        for dw in range(3):
            if dh == 1 and dw == 1:
                continue
            off = (dh - 1) * W + (dw - 1)          # tap reads h[s + off]
            t = pltpu.roll(h, (-off) % S, 1)       # t[s] = h[s + off] (wrapped)
            valid = None
            if dh == 0:
                valid = not_top
            elif dh == 2:
                valid = not_bot
            if dw == 0:
                valid = not_left if valid is None else jnp.logical_and(valid, not_left)
            elif dw == 2:
                valid = not_right if valid is None else jnp.logical_and(valid, not_right)
            t = jnp.where(valid, t, 0.0)           # zero-pad semantics
            acc = acc + t * dwk_ref[dh, dw]
    h2 = _relu6(acc + b2_ref[...])                 # (hidden, S)

    # ---- 1x1 projection conv (BN scale folded into w3) + bias (linear) ----
    y = jnp.dot(w3_ref[...], h2, preferred_element_type=jnp.float32)
    y = y + b3_ref[...]                            # (oup, S)

    if use_res_connect:
        y = y + x
    out_ref[0] = y


def inverted_residual(x_nchw, kparams, *, use_res_connect, stride=1):
    assert stride == 1, "TODO(synk): stride=2 path not implemented"
    w1, b1, dwk, b2, w3, b3 = kparams
    N, Cin, H, W = x_nchw.shape
    S = H * W
    hidden = w1.shape[0]
    oup = w3.shape[0]

    x = x_nchw.reshape(N, Cin, S).astype(jnp.float32)   # pure reshape, no transpose

    out = pl.pallas_call(
        functools.partial(inverted_residual_kernel, H=H, W=W,
                          use_res_connect=use_res_connect),
        out_shape=jax.ShapeDtypeStruct((N, oup, S), jnp.float32),
        grid_spec=pltpu.PrefetchScalarGridSpec(
            num_scalar_prefetch=0,
            grid=(N,),
            in_specs=[
                pl.BlockSpec((1, Cin, S), lambda n: (n, 0, 0)),
                pl.BlockSpec((hidden, Cin), lambda n: (0, 0)),
                pl.BlockSpec((hidden, 1), lambda n: (0, 0)),
                pl.BlockSpec((3, 3, hidden, 1), lambda n: (0, 0, 0, 0)),
                pl.BlockSpec((hidden, 1), lambda n: (0, 0)),
                pl.BlockSpec((oup, hidden), lambda n: (0, 0)),
                pl.BlockSpec((oup, 1), lambda n: (0, 0)),
            ],
            out_specs=pl.BlockSpec((1, oup, S), lambda n: (n, 0, 0)),
        ),
        compiler_params=pltpu.CompilerParams(
            dimension_semantics=("parallel",),
            vmem_limit_bytes=32 * 1024 * 1024),
    )(x, w1, b1, dwk, b2, w3, b3)
    return out.reshape(N, oup, H, W)                     # pure reshape back


# ----------------------------- parameter prep -----------------------------

def make_params(key, inp, oup, expand_ratio):
    """Raw conv weights + eval-mode BN statistics (PyTorch-equivalent)."""
    hidden = int(round(inp * expand_ratio))
    ks = jax.random.split(key, 15)
    w1 = jax.random.normal(ks[0], (hidden, inp), jnp.float32) * 0.3    # 1x1 expand (O, I)
    dwk = jax.random.normal(ks[1], (3, 3, hidden), jnp.float32) * 0.3  # depthwise (kh, kw, C)
    w3 = jax.random.normal(ks[2], (oup, hidden), jnp.float32) * 0.3    # 1x1 project (O, I)

    def bn(kg, kb, km, kv, c):
        g = 1.0 + 0.1 * jax.random.normal(kg, (c,), jnp.float32)
        b = 0.1 * jax.random.normal(kb, (c,), jnp.float32)
        m = 0.1 * jax.random.normal(km, (c,), jnp.float32)
        v = 0.5 + jnp.abs(jax.random.normal(kv, (c,), jnp.float32))
        return (g, b, m, v)

    bn1 = bn(ks[3], ks[4], ks[5], ks[6], hidden)
    bn2 = bn(ks[7], ks[8], ks[9], ks[10], hidden)
    bn3 = bn(ks[11], ks[12], ks[13], ks[14], oup)
    return (w1, bn1, dwk, bn2, w3, bn3), hidden


def fold_params(raw, eps=1e-5):
    """Fold BN scales into conv weights; biases stay as (C, 1) columns."""
    w1, bn1, dwk, bn2, w3, bn3 = raw

    def fold(bn):
        g, b, m, v = bn
        s = g / jnp.sqrt(v + eps)
        return s, b - m * s

    s1, c1 = fold(bn1)
    s2, c2 = fold(bn2)
    s3, c3 = fold(bn3)
    hidden = w1.shape[0]
    oup = w3.shape[0]
    w1f = w1 * s1[:, None]                              # (hidden, Cin)
    b1f = c1.reshape(hidden, 1)
    dwkf = (dwk * s2[None, None, :]).reshape(3, 3, hidden, 1)
    b2f = c2.reshape(hidden, 1)
    w3f = w3 * s3[:, None]                              # (oup, hidden)
    b3f = c3.reshape(oup, 1)
    return (w1f, b1f, dwkf, b2f, w3f, b3f)


# ------------------------------- reference --------------------------------

def reference(x_nchw, raw, *, use_res_connect, eps=1e-5):
    """Pure-JAX lax-conv reference in NCHW (mirrors the PyTorch module)."""
    w1, bn1, dwk, bn2, w3, bn3 = raw
    x = x_nchw.astype(jnp.float32)
    hidden = w1.shape[0]
    oup = w3.shape[0]
    dn = ('NCHW', 'OIHW', 'NCHW')

    def bn_apply(y, bn):
        g, b, m, v = bn
        s = g / jnp.sqrt(v + eps)
        return y * s.reshape(1, -1, 1, 1) + (b - m * s).reshape(1, -1, 1, 1)

    h = jax.lax.conv_general_dilated(x, w1.reshape(hidden, -1, 1, 1),
                                     (1, 1), 'VALID', dimension_numbers=dn)
    h = jnp.clip(bn_apply(h, bn1), 0.0, 6.0)
    dw_oihw = jnp.transpose(dwk, (2, 0, 1)).reshape(hidden, 1, 3, 3)
    h = jax.lax.conv_general_dilated(h, dw_oihw, (1, 1), ((1, 1), (1, 1)),
                                     dimension_numbers=dn,
                                     feature_group_count=hidden)
    h = jnp.clip(bn_apply(h, bn2), 0.0, 6.0)
    y = jax.lax.conv_general_dilated(h, w3.reshape(oup, hidden, 1, 1),
                                     (1, 1), 'VALID', dimension_numbers=dn)
    y = bn_apply(y, bn3)
    if use_res_connect:
        y = y + x
    return y


if __name__ == "__main__":
    # InvertedResidual(inp=4, oup=4, stride=1, expand_ratio=2) -> hidden_dim=8
    inp, oup, stride, expand_ratio = 4, 4, 1, 2
    use_res_connect = (stride == 1 and inp == oup)

    key = jax.random.PRNGKey(0)
    kx, kp = jax.random.split(key)
    x = jax.random.normal(kx, (2, inp, 16, 16), jnp.float32)   # NCHW, like torch
    raw, hidden = make_params(kp, inp, oup, expand_ratio)
    kparams = fold_params(raw)

    out = inverted_residual(x, kparams, use_res_connect=use_res_connect,
                            stride=stride)
    out = jax.block_until_ready(out)

    ref = reference(x, raw, use_res_connect=use_res_connect)
    assert out.shape == (2, oup, 16, 16)
    assert jnp.allclose(out, ref, atol=1e-4, rtol=1e-4), "mismatch vs reference"
    print("KERNEL_OK")
</pallas_src>

<mosaic_0001>
module attributes {stable_mosaic.version = 11 : i64} {
  func.func @inverted_residual_kernel(%arg0: i32, %arg1: memref<1x4x256xf32, #tpu.memory_space<vmem>>, %arg2: memref<8x4xf32, #tpu.memory_space<vmem>>, %arg3: memref<8x1xf32, #tpu.memory_space<vmem>>, %arg4: memref<3x3x8x1xf32, #tpu.memory_space<vmem>>, %arg5: memref<8x1xf32, #tpu.memory_space<vmem>>, %arg6: memref<4x8xf32, #tpu.memory_space<vmem>>, %arg7: memref<4x1xf32, #tpu.memory_space<vmem>>, %arg8: memref<1x4x256xf32, #tpu.memory_space<vmem>>) attributes {dimension_semantics = [#tpu.dimension_semantics<parallel>], iteration_bounds = array<i64: 2>, scalar_prefetch = 0 : i64, scratch_operands = 0 : i64, tpu.core_type = #tpu.core_type<tc>, window_params = [{transform_indices = @transform_0, window_bounds = array<i64: 1, 4, 256>}, {pipeline_mode = #tpu.pipeline_mode<synchronous>, transform_indices = @transform_1, window_bounds = array<i64: 8, 4>}, {pipeline_mode = #tpu.pipeline_mode<synchronous>, transform_indices = @transform_2, window_bounds = array<i64: 8, 1>}, {pipeline_mode = #tpu.pipeline_mode<synchronous>, transform_indices = @transform_3, window_bounds = array<i64: 3, 3, 8, 1>}, {pipeline_mode = #tpu.pipeline_mode<synchronous>, transform_indices = @transform_4, window_bounds = array<i64: 8, 1>}, {pipeline_mode = #tpu.pipeline_mode<synchronous>, transform_indices = @transform_5, window_bounds = array<i64: 4, 8>}, {pipeline_mode = #tpu.pipeline_mode<synchronous>, transform_indices = @transform_6, window_bounds = array<i64: 4, 1>}, {transform_indices = @transform_7, window_bounds = array<i64: 1, 4, 256>}]} {
    %c0 = arith.constant 0 : index
    %c0_0 = arith.constant 0 : index
    %c0_1 = arith.constant 0 : index
    %0 = vector.load %arg1[%c0, %c0_0, %c0_1] : memref<1x4x256xf32, #tpu.memory_space<vmem>>, vector<1x4x256xf32>
    %1 = vector.shape_cast %0 : vector<1x4x256xf32> to vector<4x256xf32>
    %c0_2 = arith.constant 0 : index
    %c0_3 = arith.constant 0 : index
    %2 = vector.load %arg2[%c0_2, %c0_3] : memref<8x4xf32, #tpu.memory_space<vmem>>, vector<8x4xf32>
    %cst = arith.constant dense<0.000000e+00> : vector<8x256xf32>
    %3 = tpu.matmul %2, %1, %cst {dimension_numbers = #tpu.dot_dimension_numbers<[1], [0], [0], [1], [0, 0, 1, 1], [], []>} : vector<8x4xf32>, vector<4x256xf32>, vector<8x256xf32> -> vector<8x256xf32>
    %c0_4 = arith.constant 0 : index
    %c0_5 = arith.constant 0 : index
    %4 = vector.load %arg3[%c0_4, %c0_5] : memref<8x1xf32, #tpu.memory_space<vmem>>, vector<8x1xf32>
    %5 = vector.broadcast %4 : vector<8x1xf32> to vector<8x256xf32>
    %6 = arith.addf %3, %5 : vector<8x256xf32>
    %cst_6 = arith.constant 0.000000e+00 : f32
    %cst_7 = arith.constant 6.000000e+00 : f32
    %7 = vector.broadcast %cst_6 : f32 to vector<8x256xf32>
    %8 = arith.maximumf %7, %6 : vector<8x256xf32>
    %9 = vector.broadcast %cst_7 : f32 to vector<8x256xf32>
    %10 = arith.minimumf %9, %8 : vector<8x256xf32>
    %11 = tpu.iota {dimensions = array<i32: 1>} : vector<1x256xi32>
    %c16_i32 = arith.constant 16 : i32
    %c0_i32 = arith.constant 0 : i32
    %12 = arith.cmpi eq, %c16_i32, %c0_i32 : i32
    %c1_i32 = arith.constant 1 : i32
    %13 = arith.select %12, %c1_i32, %c16_i32 : i32
    %14 = vector.broadcast %13 : i32 to vector<1x256xi32>
    %15 = arith.remsi %11, %14 : vector<1x256xi32>
    %c0_i32_8 = arith.constant 0 : i32
    %16 = vector.broadcast %c0_i32_8 : i32 to vector<1x256xi32>
    %17 = arith.cmpi ne, %15, %16 : vector<1x256xi32>
    %c0_i32_9 = arith.constant 0 : i32
    %18 = vector.broadcast %c0_i32_9 : i32 to vector<1x256xi32>
    %19 = arith.cmpi slt, %15, %18 : vector<1x256xi32>
    %c0_i32_10 = arith.constant 0 : i32
    %20 = arith.cmpi slt, %13, %c0_i32_10 : i32
    %21 = vector.broadcast %20 : i1 to vector<1x256xi1>
    %22 = vector.broadcast %21 : vector<1x256xi1> to vector<1x256xi1>
    %23 = arith.xori %19, %22 : vector<1x256xi1>
    %24 = arith.andi %23, %17 : vector<1x256xi1>
    %25 = vector.broadcast %13 : i32 to vector<1x256xi32>
    %26 = arith.addi %15, %25 : vector<1x256xi32>
    %27 = arith.select %24, %26, %15 : vector<1x256xi1>, vector<1x256xi32>
    %c16_i32_11 = arith.constant 16 : i32
    %28 = vector.broadcast %c16_i32_11 : i32 to vector<1x256xi32>
    %29 = arith.cmpi sge, %11, %28 : vector<1x256xi32>
    %c240_i32 = arith.constant 240 : i32
    %30 = vector.broadcast %c240_i32 : i32 to vector<1x256xi32>
    %31 = arith.cmpi slt, %11, %30 : vector<1x256xi32>
    %c0_i32_12 = arith.constant 0 : i32
    %32 = vector.broadcast %c0_i32_12 : i32 to vector<1x256xi32>
    %33 = arith.cmpi ne, %27, %32 : vector<1x256xi32>
    %c15_i32 = arith.constant 15 : i32
    %34 = vector.broadcast %c15_i32 : i32 to vector<1x256xi32>
    %35 = arith.cmpi ne, %27, %34 : vector<1x256xi32>
    %c1 = arith.constant 1 : index
    %c1_13 = arith.constant 1 : index
    %c0_14 = arith.constant 0 : index
    %c0_15 = arith.constant 0 : index
    %36 = vector.load %arg4[%c1, %c1_13, %c0_14, %c0_15] : memref<3x3x8x1xf32, #tpu.memory_space<vmem>>, vector<1x1x8x1xf32>
    %37 = vector.shape_cast %36 : vector<1x1x8x1xf32> to vector<8x1xf32>
    %38 = vector.broadcast %37 : vector<8x1xf32> to vector<8x256xf32>
    %39 = arith.mulf %10, %38 : vector<8x256xf32>
    %c17_i32 = arith.constant 17 : i32
    %40 = tpu.dynamic_rotate %10 by %c17_i32 dim 1 : vector<8x256xf32>, i32 -> vector<8x256xf32>
    %41 = arith.andi %29, %33 : vector<1x256xi1>
    %cst_16 = arith.constant 0.000000e+00 : f32
    %42 = vector.shape_cast %41 : vector<1x256xi1> to vector<1x256xi1>
    %43 = vector.broadcast %42 : vector<1x256xi1> to vector<8x256xi1>
    %44 = vector.broadcast %cst_16 : f32 to vector<8x256xf32>
    %45 = arith.select %43, %40, %44 : vector<8x256xi1>, vector<8x256xf32>
    %c0_17 = arith.constant 0 : index
    %c0_18 = arith.constant 0 : index
    %c0_19 = arith.constant 0 : index
    %c0_20 = arith.constant 0 : index
    %46 = vector.load %arg4[%c0_17, %c0_18, %c0_19, %c0_20] : memref<3x3x8x1xf32, #tpu.memory_space<vmem>>, vector<1x1x8x1xf32>
    %47 = vector.shape_cast %46 : vector<1x1x8x1xf32> to vector<8x1xf32>
    %48 = vector.broadcast %47 : vector<8x1xf32> to vector<8x256xf32>
    %49 = arith.mulf %45, %48 : vector<8x256xf32>
    %50 = arith.addf %39, %49 : vector<8x256xf32>
    %c16_i32_21 = arith.constant 16 : i32
    %51 = tpu.dynamic_rotate %10 by %c16_i32_21 dim 1 : vector<8x256xf32>, i32 -> vector<8x256xf32>
    %cst_22 = arith.constant 0.000000e+00 : f32
    %52 = vector.shape_cast %29 : vector<1x256xi1> to vector<1x256xi1>
    %53 = vector.broadcast %52 : vector<1x256xi1> to vector<8x256xi1>
    %54 = vector.broadcast %cst_22 : f32 to vector<8x256xf32>
    %55 = arith.select %53, %51, %54 : vector<8x256xi1>, vector<8x256xf32>
    %c0_23 = arith.constant 0 : index
    %c1_24 = arith.constant 1 : index
    %c0_25 = arith.constant 0 : index
    %c0_26 = arith.constant 0 : index
    %56 = vector.load %arg4[%c0_23, %c1_24, %c0_25, %c0_26] : memref<3x3x8x1xf32, #tpu.memory_space<vmem>>, vector<1x1x8x1xf32>
    %57 = vector.shape_cast %56 : vector<1x1x8x1xf32> to vector<8x1xf32>
    %58 = vector.broadcast %57 : vector<8x1xf32> to vector<8x256xf32>
    %59 = arith.mulf %55, %58 : vector<8x256xf32>
    %60 = arith.addf %50, %59 : vector<8x256xf32>
    %c15_i32_27 = arith.constant 15 : i32
    %61 = tpu.dynamic_rotate %10 by %c15_i32_27 dim 1 : vector<8x256xf32>, i32 -> vector<8x256xf32>
    %62 = arith.andi %29, %35 : vector<1x256xi1>
    %cst_28 = arith.constant 0.000000e+00 : f32
    %63 = vector.shape_cast %62 : vector<1x256xi1> to vector<1x256xi1>
    %64 = vector.broadcast %63 : vector<1x256xi1> to vector<8x256xi1>
    %65 = vector.broadcast %cst_28 : f32 to vector<8x256xf32>
    %66 = arith.select %64, %61, %65 : vector<8x256xi1>, vector<8x256xf32>
    %c0_29 = arith.constant 0 : index
    %c2 = arith.constant 2 : index
    %c0_30 = arith.constant 0 : index
    %c0_31 = arith.constant 0 : index
    %67 = vector.load %arg4[%c0_29, %c2, %c0_30, %c0_31] : memref<3x3x8x1xf32, #tpu.memory_space<vmem>>, vector<1x1x8x1xf32>
    %68 = vector.shape_cast %67 : vector<1x1x8x1xf32> to vector<8x1xf32>
    %69 = vector.broadcast %68 : vector<8x1xf32> to vector<8x256xf32>
    %70 = arith.mulf %66, %69 : vector<8x256xf32>
    %71 = arith.addf %60, %70 : vector<8x256xf32>
    %c1_i32_32 = arith.constant 1 : i32
    %72 = tpu.dynamic_rotate %10 by %c1_i32_32 dim 1 : vector<8x256xf32>, i32 -> vector<8x256xf32>
    %cst_33 = arith.constant 0.000000e+00 : f32
    %73 = vector.shape_cast %33 : vector<1x256xi1> to vector<1x256xi1>
    %74 = vector.broadcast %73 : vector<1x256xi1> to vector<8x256xi1>
    %75 = vector.broadcast %cst_33 : f32 to vector<8x256xf32>
    %76 = arith.select %74, %72, %75 : vector<8x256xi1>, vector<8x256xf32>
    %c1_34 = arith.constant 1 : index
    %c0_35 = arith.constant 0 : index
    %c0_36 = arith.constant 0 : index
    %c0_37 = arith.constant 0 : index
    %77 = vector.load %arg4[%c1_34, %c0_35, %c0_36, %c0_37] : memref<3x3x8x1xf32, #tpu.memory_space<vmem>>, vector<1x1x8x1xf32>
    %78 = vector.shape_cast %77 : vector<1x1x8x1xf32> to vector<8x1xf32>
    %79 = vector.broadcast %78 : vector<8x1xf32> to vector<8x256xf32>
    %80 = arith.mulf %76, %79 : vector<8x256xf32>
    %81 = arith.addf %71, %80 : vector<8x256xf32>
    %c255_i32 = arith.constant 255 : i32
    %82 = tpu.dynamic_rotate %10 by %c255_i32 dim 1 : vector<8x256xf32>, i32 -> vector<8x256xf32>
    %cst_38 = arith.constant 0.000000e+00 : f32
    %83 = vector.shape_cast %35 : vector<1x256xi1> to vector<1x256xi1>
    %84 = vector.broadcast %83 : vector<1x256xi1> to vector<8x256xi1>
    %85 = vector.broadcast %cst_38 : f32 to vector<8x256xf32>
    %86 = arith.select %84, %82, %85 : vector<8x256xi1>, vector<8x256xf32>
    %c1_39 = arith.constant 1 : index
    %c2_40 = arith.constant 2 : index
    %c0_41 = arith.constant 0 : index
    %c0_42 = arith.constant 0 : index
    %87 = vector.load %arg4[%c1_39, %c2_40, %c0_41, %c0_42] : memref<3x3x8x1xf32, #tpu.memory_space<vmem>>, vector<1x1x8x1xf32>
    %88 = vector.shape_cast %87 : vector<1x1x8x1xf32> to vector<8x1xf32>
    %89 = vector.broadcast %88 : vector<8x1xf32> to vector<8x256xf32>
    %90 = arith.mulf %86, %89 : vector<8x256xf32>
    %91 = arith.addf %81, %90 : vector<8x256xf32>
    %c241_i32 = arith.constant 241 : i32
    %92 = tpu.dynamic_rotate %10 by %c241_i32 dim 1 : vector<8x256xf32>, i32 -> vector<8x256xf32>
    %93 = arith.andi %31, %33 : vector<1x256xi1>
    %cst_43 = arith.constant 0.000000e+00 : f32
    %94 = vector.shape_cast %93 : vector<1x256xi1> to vector<1x256xi1>
    %95 = vector.broadcast %94 : vector<1x256xi1> to vector<8x256xi1>
    %96 = vector.broadcast %cst_43 : f32 to vector<8x256xf32>
    %97 = arith.select %95, %92, %96 : vector<8x256xi1>, vector<8x256xf32>
    %c2_44 = arith.constant 2 : index
    %c0_45 = arith.constant 0 : index
    %c0_46 = arith.constant 0 : index
    %c0_47 = arith.constant 0 : index
    %98 = vector.load %arg4[%c2_44, %c0_45, %c0_46, %c0_47] : memref<3x3x8x1xf32, #tpu.memory_space<vmem>>, vector<1x1x8x1xf32>
    %99 = vector.shape_cast %98 : vector<1x1x8x1xf32> to vector<8x1xf32>
    %100 = vector.broadcast %99 : vector<8x1xf32> to vector<8x256xf32>
    %101 = arith.mulf %97, %100 : vector<8x256xf32>
    %102 = arith.addf %91, %101 : vector<8x256xf32>
    %c240_i32_48 = arith.constant 240 : i32
    %103 = tpu.dynamic_rotate %10 by %c240_i32_48 dim 1 : vector<8x256xf32>, i32 -> vector<8x256xf32>
    %cst_49 = arith.constant 0.000000e+00 : f32
    %104 = vector.shape_cast %31 : vector<1x256xi1> to vector<1x256xi1>
    %105 = vector.broadcast %104 : vector<1x256xi1> to vector<8x256xi1>
    %106 = vector.broadcast %cst_49 : f32 to vector<8x256xf32>
    %107 = arith.select %105, %103, %106 : vector<8x256xi1>, vector<8x256xf32>
    %c2_50 = arith.constant 2 : index
    %c1_51 = arith.constant 1 : index
    %c0_52 = arith.constant 0 : index
    %c0_53 = arith.constant 0 : index
    %108 = vector.load %arg4[%c2_50, %c1_51, %c0_52, %c0_53] : memref<3x3x8x1xf32, #tpu.memory_space<vmem>>, vector<1x1x8x1xf32>
    %109 = vector.shape_cast %108 : vector<1x1x8x1xf32> to vector<8x1xf32>
    %110 = vector.broadcast %109 : vector<8x1xf32> to vector<8x256xf32>
    %111 = arith.mulf %107, %110 : vector<8x256xf32>
    %112 = arith.addf %102, %111 : vector<8x256xf32>
    %c239_i32 = arith.constant 239 : i32
    %113 = tpu.dynamic_rotate %10 by %c239_i32 dim 1 : vector<8x256xf32>, i32 -> vector<8x256xf32>
    %114 = arith.andi %31, %35 : vector<1x256xi1>
    %cst_54 = arith.constant 0.000000e+00 : f32
    %115 = vector.shape_cast %114 : vector<1x256xi1> to vector<1x256xi1>
    %116 = vector.broadcast %115 : vector<1x256xi1> to vector<8x256xi1>
    %117 = vector.broadcast %cst_54 : f32 to vector<8x256xf32>
    %118 = arith.select %116, %113, %117 : vector<8x256xi1>, vector<8x256xf32>
    %c2_55 = arith.constant 2 : index
    %c2_56 = arith.constant 2 : index
    %c0_57 = arith.constant 0 : index
    %c0_58 = arith.constant 0 : index
    %119 = vector.load %arg4[%c2_55, %c2_56, %c0_57, %c0_58] : memref<3x3x8x1xf32, #tpu.memory_space<vmem>>, vector<1x1x8x1xf32>
    %120 = vector.shape_cast %119 : vector<1x1x8x1xf32> to vector<8x1xf32>
    %121 = vector.broadcast %120 : vector<8x1xf32> to vector<8x256xf32>
    %122 = arith.mulf %118, %121 : vector<8x256xf32>
    %123 = arith.addf %112, %122 : vector<8x256xf32>
    %c0_59 = arith.constant 0 : index
    %c0_60 = arith.constant 0 : index
    %124 = vector.load %arg5[%c0_59, %c0_60] : memref<8x1xf32, #tpu.memory_space<vmem>>, vector<8x1xf32>
    %125 = vector.broadcast %124 : vector<8x1xf32> to vector<8x256xf32>
    %126 = arith.addf %123, %125 : vector<8x256xf32>
    %cst_61 = arith.constant 0.000000e+00 : f32
    %cst_62 = arith.constant 6.000000e+00 : f32
    %127 = vector.broadcast %cst_61 : f32 to vector<8x256xf32>
    %128 = arith.maximumf %127, %126 : vector<8x256xf32>
    %129 = vector.broadcast %cst_62 : f32 to vector<8x256xf32>
    %130 = arith.minimumf %129, %128 : vector<8x256xf32>
    %c0_63 = arith.constant 0 : index
    %c0_64 = arith.constant 0 : index
    %131 = vector.load %arg6[%c0_63, %c0_64] : memref<4x8xf32, #tpu.memory_space<vmem>>, vector<4x8xf32>
    %cst_65 = arith.constant dense<0.000000e+00> : vector<4x256xf32>
    %132 = tpu.matmul %131, %130, %cst_65 {dimension_numbers = #tpu.dot_dimension_numbers<[1], [0], [0], [1], [0, 0, 1, 1], [], []>} : vector<4x8xf32>, vector<8x256xf32>, vector<4x256xf32> -> vector<4x256xf32>
    %c0_66 = arith.constant 0 : index
    %c0_67 = arith.constant 0 : index
    %133 = vector.load %arg7[%c0_66, %c0_67] : memref<4x1xf32, #tpu.memory_space<vmem>>, vector<4x1xf32>
    %134 = vector.broadcast %133 : vector<4x1xf32> to vector<4x256xf32>
    %135 = arith.addf %132, %134 : vector<4x256xf32>
    %136 = arith.addf %135, %1 : vector<4x256xf32>
    %c0_68 = arith.constant 0 : index
    %c0_69 = arith.constant 0 : index
    %c0_70 = arith.constant 0 : index
    %137 = vector.load %arg8[%c0_68, %c0_69, %c0_70] : memref<1x4x256xf32, #tpu.memory_space<vmem>>, vector<1x4x256xf32>
    %138 = vector.shape_cast %137 : vector<1x4x256xf32> to vector<4x256xf32>
    %139 = vector.shape_cast %136 : vector<4x256xf32> to vector<1x4x256xf32>
    tpu.vector_store %arg8[%c0_68, %c0_69, %c0_70], %139 {strides = array<i32>} : memref<1x4x256xf32, #tpu.memory_space<vmem>>, vector<1x4x256xf32>,
    return
  }
  func.func @transform_0(%arg0: i32) -> (i32, i32, i32) {
    %c0_i32 = arith.constant 0 : i32
    %c0_i32_0 = arith.constant 0 : i32
    %c0_i32_1 = arith.constant 0 : i32
    return %arg0, %c0_i32, %c0_i32_0 : i32, i32, i32
  }
  func.func @transform_1(%arg0: i32) -> (i32, i32) {
    %c0_i32 = arith.constant 0 : i32
    %c0_i32_0 = arith.constant 0 : i32
    %c0_i32_1 = arith.constant 0 : i32
    return %c0_i32, %c0_i32_0 : i32, i32
  }
  func.func @transform_2(%arg0: i32) -> (i32, i32) {
    %c0_i32 = arith.constant 0 : i32
    %c0_i32_0 = arith.constant 0 : i32
    %c0_i32_1 = arith.constant 0 : i32
    return %c0_i32, %c0_i32_0 : i32, i32
  }
  func.func @transform_3(%arg0: i32) -> (i32, i32, i32, i32) {
    %c0_i32 = arith.constant 0 : i32
    %c0_i32_0 = arith.constant 0 : i32
    %c0_i32_1 = arith.constant 0 : i32
    %c0_i32_2 = arith.constant 0 : i32
    %c0_i32_3 = arith.constant 0 : i32
    return %c0_i32, %c0_i32_0, %c0_i32_1, %c0_i32_2 : i32, i32, i32, i32
  }
  func.func @transform_4(%arg0: i32) -> (i32, i32) {
    %c0_i32 = arith.constant 0 : i32
    %c0_i32_0 = arith.constant 0 : i32
    %c0_i32_1 = arith.constant 0 : i32
    return %c0_i32, %c0_i32_0 : i32, i32
  }
  func.func @transform_5(%arg0: i32) -> (i32, i32) {
    %c0_i32 = arith.constant 0 : i32
    %c0_i32_0 = arith.constant 0 : i32
    %c0_i32_1 = arith.constant 0 : i32
    return %c0_i32, %c0_i32_0 : i32, i32
  }
  func.func @transform_6(%arg0: i32) -> (i32, i32) {
    %c0_i32 = arith.constant 0 : i32
    %c0_i32_0 = arith.constant 0 : i32
    %c0_i32_1 = arith.constant 0 : i32
    return %c0_i32, %c0_i32_0 : i32, i32
  }
  func.func @transform_7(%arg0: i32) -> (i32, i32, i32) {
    %c0_i32 = arith.constant 0 : i32
    %c0_i32_0 = arith.constant 0 : i32
    %c0_i32_1 = arith.constant 0 : i32
    return %arg0, %c0_i32, %c0_i32_0 : i32, i32, i32
  }
}

</mosaic_0001>

<llo_original>
// kernel: tpu_custom_call.1
$region0: #{tpu_custom_call.1}
  #allocation0 [shape = 'u32[]', space=smem, size = 0x4, offset = 0x4, fixed_abs, tag = 'smem constant byte address 0x4 - core index']
  #allocation1 [shape = 'u32[72,128]{1,0:T(1,128)}', space=vmem, size = 0x9000, scoped, tag = 'internal scratch']
  %s0 = inlined_call_operand.vmem [shape: f32[2,4,256], index: 0, kind: input, shape index: {}]
  %s1 = inlined_call_operand.vmem [shape: f32[8,4], index: 1, kind: input, shape index: {}]
  %s2 = inlined_call_operand.vmem [shape: f32[8,1], index: 2, kind: input, shape index: {}]
  %s3 = inlined_call_operand.vmem [shape: f32[3,3,8,1], index: 3, kind: input, shape index: {}]
  %s4 = inlined_call_operand.vmem [shape: f32[8,1], index: 4, kind: input, shape index: {}]
  %s5 = inlined_call_operand.vmem [shape: f32[4,8], index: 5, kind: input, shape index: {}]
  %s6 = inlined_call_operand.vmem [shape: f32[4,1], index: 6, kind: input, shape index: {}]
  %s7 = inlined_call_operand.hbm [shape: f32[2,4,256], index: 7, kind: output, shape index: {}]
  %s8 = sld [smem:[#allocation0]]
  $region61: #{tpu_custom_call.1} parent=0
    _
  %s10 = ssub.s32 1, %s8
  %s11 = scalar_select 0, %s10, %s8
  $region1: #{tpu_custom_call.1} parent=0
    #allocation2 [shape = 'u8[8192]{0}', space=vmem, size = 0x2000, scoped, tag = 'output window, operand 0']
    #allocation3 [shape = 's32[2]{0}', space=sflag, size = 0x8, scoped, tag = 'scoped memory for tpu_custom_call.1']
    %12 = vsyncpa [#allocation3], 0
    %s13 = scalar_lea.sflag [#allocation3], 1
    %14 = vsyncpa %s13, 0
    loop: start=0, step=1, limit=4
    $region2: #{tpu_custom_call.1} parent=1 // loop_pre_header
      _
    $region3: #{tpu_custom_call.1} parent=1 // loop_header
      %s16 = sphi 0, %s20
      %p17 = scmp.ge.s32.totalorder %s16, 4
      %s26 = sphi 0, %s28
      %s29 = sphi 0, %s26
      %s30 = sphi 0, %s29
      %s46 = sphi 0, %s30
      %s50 = sphi 0, %s50
      %s52 = sphi 0, %s50
      %s53 = sphi 0, %s52
      %s67 = sphi 0, %s53
      %s71 = sphi 0, %s71
      %s73 = sphi 0, %s71
      %s74 = sphi 0, %s73
      %s88 = sphi 0, %s74
      %s92 = sphi 0, %s92
      %s94 = sphi 0, %s92
      %s95 = sphi 0, %s94
      %s109 = sphi 0, %s95
      %s113 = sphi 0, %s113
      %s115 = sphi 0, %s113
      %s116 = sphi 0, %s115
      %s130 = sphi 0, %s116
      %s134 = sphi 0, %s134
      %s136 = sphi 0, %s134
      %s137 = sphi 0, %s136
      %s151 = sphi 0, %s137
      %s155 = sphi 0, %s155
      %s157 = sphi 0, %s155
      %s158 = sphi 0, %s157
      %s172 = sphi 0, %s158
      %s178 = sphi 0, %s180
      %s181 = sphi 0, %s178
      %s182 = sphi 0, %s181
      %s198 = sphi 0, %s182
    $region4: #{tpu_custom_call.1} parent=1 // loop_header_branch
      %19 = sbr.rel (%p17) target = $region8
    $region5: #{tpu_custom_call.1} parent=1 // loop_body
      %s21 = ssub.s32 %s16, 1
      %s22 = ssub.s32 %s16, 2
      %s23 = sadd.s32 %s16, 1
      %s24 = ssub.s32 %s16, %s23
      %p25 = scmp.eq.s32.totalorder %s24, 0
      %s27 = sadd.s32 %s26, 1
      %s28 = scalar_select %p25, %s26, %s27
      %p31 = pneg %p25
      %p32 = scmp.eq.s32.totalorder %s16, 1
      %p33 = por %p31, %p32
      %p34 = scmp.ne.s32.totalorder %s26, %s29
      %p35 = scmp.eq.s32.totalorder %s16, 0
      %p36 = por %p34, %p35
      %p37 = scmp.ne.s32.totalorder %s26, %s29
      %p38 = scmp.eq.s32.totalorder %s21, 1
      %p39 = por %p37, %p38
      %p40 = scmp.ne.s32.totalorder %s29, %s30
      %p41 = scmp.eq.s32.totalorder %s21, 0
      %p42 = por %p40, %p41
      %p43 = scmp.ne.s32.totalorder %s29, %s30
      %p44 = scmp.eq.s32.totalorder %s22, 1
      %p45 = por %p43, %p44
      %p47 = scmp.ne.s32.totalorder %s30, %s46
      %p48 = scmp.eq.s32.totalorder %s22, 0
      %p49 = por %p47, %p48
      %s51 = sadd.s32 %s50, 1
      %p54 = scmp.eq.s32.totalorder %s16, 1
      %p55 = scmp.ne.s32.totalorder %s50, %s52
      %p56 = scmp.eq.s32.totalorder %s16, 0
      %p57 = por %p55, %p56
      %p58 = scmp.ne.s32.totalorder %s50, %s52
      %p59 = scmp.eq.s32.totalorder %s21, 1
      %p60 = por %p58, %p59
      %p61 = scmp.ne.s32.totalorder %s52, %s53
      %p62 = scmp.eq.s32.totalorder %s21, 0
      %p63 = por %p61, %p62
      %p64 = scmp.ne.s32.totalorder %s52, %s53
      %p65 = scmp.eq.s32.totalorder %s22, 1
      %p66 = por %p64, %p65
      %p68 = scmp.ne.s32.totalorder %s53, %s67
      %p69 = scmp.eq.s32.totalorder %s22, 0
      %p70 = por %p68, %p69
      %s72 = sadd.s32 %s71, 1
      %p75 = scmp.eq.s32.totalorder %s16, 1
      %p76 = scmp.ne.s32.totalorder %s71, %s73
      %p77 = scmp.eq.s32.totalorder %s16, 0
      %p78 = por %p76, %p77
      %p79 = scmp.ne.s32.totalorder %s71, %s73
      %p80 = scmp.eq.s32.totalorder %s21, 1
      %p81 = por %p79, %p80
      %p82 = scmp.ne.s32.totalorder %s73, %s74
      %p83 = scmp.eq.s32.totalorder %s21, 0
      %p84 = por %p82, %p83
      %p85 = scmp.ne.s32.totalorder %s73, %s74
      %p86 = scmp.eq.s32.totalorder %s22, 1
      %p87 = por %p85, %p86
      %p89 = scmp.ne.s32.totalorder %s74, %s88
      %p90 = scmp.eq.s32.totalorder %s22, 0
      %p91 = por %p89, %p90
      %s93 = sadd.s32 %s92, 1
      %p96 = scmp.eq.s32.totalorder %s16, 1
      %p97 = scmp.ne.s32.totalorder %s92, %s94
      %p98 = scmp.eq.s32.totalorder %s16, 0
      %p99 = por %p97, %p98
      %p100 = scmp.ne.s32.totalorder %s92, %s94
      %p101 = scmp.eq.s32.totalorder %s21, 1
      %p102 = por %p100, %p101
      %p103 = scmp.ne.s32.totalorder %s94, %s95
      %p104 = scmp.eq.s32.totalorder %s21, 0
      %p105 = por %p103, %p104
      %p106 = scmp.ne.s32.totalorder %s94, %s95
      %p107 = scmp.eq.s32.totalorder %s22, 1
      %p108 = por %p106, %p107
      %p110 = scmp.ne.s32.totalorder %s95, %s109
      %p111 = scmp.eq.s32.totalorder %s22, 0
      %p112 = por %p110, %p111
      %s114 = sadd.s32 %s113, 1
      %p117 = scmp.eq.s32.totalorder %s16, 1
      %p118 = scmp.ne.s32.totalorder %s113, %s115
      %p119 = scmp.eq.s32.totalorder %s16, 0
      %p120 = por %p118, %p119
      %p121 = scmp.ne.s32.totalorder %s113, %s115
      %p122 = scmp.eq.s32.totalorder %s21, 1
      %p123 = por %p121, %p122
      %p124 = scmp.ne.s32.totalorder %s115, %s116
      %p125 = scmp.eq.s32.totalorder %s21, 0
      %p126 = por %p124, %p125
      %p127 = scmp.ne.s32.totalorder %s115, %s116
      %p128 = scmp.eq.s32.totalorder %s22, 1
      %p129 = por %p127, %p128
      %p131 = scmp.ne.s32.totalorder %s116, %s130
      %p132 = scmp.eq.s32.totalorder %s22, 0
      %p133 = por %p131, %p132
      %s135 = sadd.s32 %s134, 1
      %p138 = scmp.eq.s32.totalorder %s16, 1
      %p139 = scmp.ne.s32.totalorder %s134, %s136
      %p140 = scmp.eq.s32.totalorder %s16, 0
      %p141 = por %p139, %p140
      %p142 = scmp.ne.s32.totalorder %s134, %s136
      %p143 = scmp.eq.s32.totalorder %s21, 1
      %p144 = por %p142, %p143
      %p145 = scmp.ne.s32.totalorder %s136, %s137
      %p146 = scmp.eq.s32.totalorder %s21, 0
      %p147 = por %p145, %p146
      %p148 = scmp.ne.s32.totalorder %s136, %s137
      %p149 = scmp.eq.s32.totalorder %s22, 1
      %p150 = por %p148, %p149
      %p152 = scmp.ne.s32.totalorder %s137, %s151
      %p153 = scmp.eq.s32.totalorder %s22, 0
      %p154 = por %p152, %p153
      %s156 = sadd.s32 %s155, 1
      %p159 = scmp.eq.s32.totalorder %s16, 1
      %p160 = scmp.ne.s32.totalorder %s155, %s157
      %p161 = scmp.eq.s32.totalorder %s16, 0
      %p162 = por %p160, %p161
      %p163 = scmp.ne.s32.totalorder %s155, %s157
      %p164 = scmp.eq.s32.totalorder %s21, 1
      %p165 = por %p163, %p164
      %p166 = scmp.ne.s32.totalorder %s157, %s158
      %p167 = scmp.eq.s32.totalorder %s21, 0
      %p168 = por %p166, %p167
      %p169 = scmp.ne.s32.totalorder %s157, %s158
      %p170 = scmp.eq.s32.totalorder %s22, 1
      %p171 = por %p169, %p170
      %p173 = scmp.ne.s32.totalorder %s158, %s172
      %p174 = scmp.eq.s32.totalorder %s22, 0
      %p175 = por %p173, %p174
      %s176 = ssub.s32 %s16, %s23
      %p177 = scmp.eq.s32.totalorder %s176, 0
      %s179 = sadd.s32 %s178, 1
      %s180 = scalar_select %p177, %s178, %s179
      %p183 = pneg %p177
      %p184 = scmp.eq.s32.totalorder %s16, 1
      %p185 = por %p183, %p184
      %p186 = scmp.ne.s32.totalorder %s178, %s181
      %p187 = scmp.eq.s32.totalorder %s16, 0
      %p188 = por %p186, %p187
      %p189 = scmp.ne.s32.totalorder %s178, %s181
      %p190 = scmp.eq.s32.totalorder %s21, 1
      %p191 = por %p189, %p190
      %p192 = scmp.ne.s32.totalorder %s181, %s182
      %p193 = scmp.eq.s32.totalorder %s21, 0
      %p194 = por %p192, %p193
      %p195 = scmp.ne.s32.totalorder %s181, %s182
      %p196 = scmp.eq.s32.totalorder %s22, 1
      %p197 = por %p195, %p196
      %p199 = scmp.ne.s32.totalorder %s182, %s198
      %p200 = scmp.eq.s32.totalorder %s22, 0
      %p201 = por %p199, %p200
      %p202 = scmp.le.s32.totalorder 1, %s16
      %p203 = scmp.lt.s32.totalorder %s16, 3
      %p204 = pnand %p202, %p203
      %p205 = pneg %p204
      // Predicated region
      $region9: #{tpu_custom_call.1} parent=5 // pred_check
        _
      $region10: #{tpu_custom_call.1} parent=5 // pred_check_branch
        %207 = sbr.rel (%p204) target = $region12
      $region11: #{tpu_custom_call.1} parent=5 // pred_region
        %s208 = ssub.s32 %s16, 1
        // Predicated region
        $region13: #{tpu_custom_call.1} parent=11 // pred_check
          %p209 = pneg %p63
        $region14: #{tpu_custom_call.1} parent=11 // pred_check_branch
          %211 = sbr.rel (%p209) target = $region16
        $region15: #{tpu_custom_call.1} parent=11 // pred_region
          _
        $region16: #{tpu_custom_call.1} parent=11 // pred_fallthru
          _
        // Predicated region
        $region17: #{tpu_custom_call.1} parent=11 // pred_check
          %p212 = pneg %p84
        $region18: #{tpu_custom_call.1} parent=11 // pred_check_branch
          %214 = sbr.rel (%p212) target = $region20
        $region19: #{tpu_custom_call.1} parent=11 // pred_region
          _
        $region20: #{tpu_custom_call.1} parent=11 // pred_fallthru
          _
        // Predicated region
        $region21: #{tpu_custom_call.1} parent=11 // pred_check
          %p215 = pneg %p105
        $region22: #{tpu_custom_call.1} parent=11 // pred_check_branch
          %217 = sbr.rel (%p215) target = $region24
        $region23: #{tpu_custom_call.1} parent=11 // pred_region
          _
        $region24: #{tpu_custom_call.1} parent=11 // pred_fallthru
          _
        // Predicated region
        $region25: #{tpu_custom_call.1} parent=11 // pred_check
          %p218 = pneg %p126
        $region26: #{tpu_custom_call.1} parent=11 // pred_check_branch
          %220 = sbr.rel (%p218) target = $region28
        $region27: #{tpu_custom_call.1} parent=11 // pred_region
          _
        $region28: #{tpu_custom_call.1} parent=11 // pred_fallthru
          _
        // Predicated region
        $region29: #{tpu_custom_call.1} parent=11 // pred_check
          %p221 = pneg %p147
        $region30: #{tpu_custom_call.1} parent=11 // pred_check_branch
          %223 = sbr.rel (%p221) target = $region32
        $region31: #{tpu_custom_call.1} parent=11 // pred_region
          _
        $region32: #{tpu_custom_call.1} parent=11 // pred_fallthru
          _
        // Predicated region
        $region33: #{tpu_custom_call.1} parent=11 // pred_check
          %p224 = pneg %p168
        $region34: #{tpu_custom_call.1} parent=11 // pred_check_branch
          %226 = sbr.rel (%p224) target = $region36
        $region35: #{tpu_custom_call.1} parent=11 // pred_region
          _
        $region36: #{tpu_custom_call.1} parent=11 // pred_fallthru
          _
      $region12: #{tpu_custom_call.1} parent=5 // pred_fallthru
        _
      %p227 = scmp.lt.s32.totalorder %s16, 2
      // Predicated region
      $region37: #{tpu_custom_call.1} parent=5 // pred_check
        %p228 = pneg %p227
      $region38: #{tpu_custom_call.1} parent=5 // pred_check_branch
        %230 = sbr.rel (%p228) target = $region40
      $region39: #{tpu_custom_call.1} parent=5 // pred_region
        // Predicated region
        $region41: #{tpu_custom_call.1} parent=39 // pred_check
          %p231 = pneg %p36
        $region42: #{tpu_custom_call.1} parent=39 // pred_check_branch
          %233 = sbr.rel (%p231) target = $region44
        $region43: #{tpu_custom_call.1} parent=39 // pred_region
          %p234 = scmp.lt.s32.totalorder %s16, 1
          %s235 = scalar_select %p234, %s16, 1
          %s236 = smul.addr %s235, 2
          %s237 = smul.addr %s236, 4
          %s238 = scalar_lea.vmem %s0, %s237
        $region44: #{tpu_custom_call.1} parent=39 // pred_fallthru
          _
      $region40: #{tpu_custom_call.1} parent=5 // pred_fallthru
        _
      %p239 = scmp.le.s32.totalorder 1, %s16
      %p240 = scmp.lt.s32.totalorder %s16, 3
      %p241 = pnand %p239, %p240
      %p242 = pneg %p241
      // Predicated region
      $region45: #{tpu_custom_call.1} parent=5 // pred_check
        _
      $region46: #{tpu_custom_call.1} parent=5 // pred_check_branch
        %244 = sbr.rel (%p241) target = $region48
      $region47: #{tpu_custom_call.1} parent=5 // pred_region
        %s245 = ssub.s32 %s16, 1
        %p246 = scmp.lt.s32.totalorder %s21, 1
        %s247 = scalar_select %p246, %s21, 1
        %s248 = smul.addr %s247, 2
        %s249 = smul.addr %s248, 4
        %s250 = scalar_lea.vmem %s0, %s249
        %p251 = pneg %p42
        %p252 = pneg %p39
        %p253 = pneg %p63
        %p254 = pneg %p60
        %p255 = pneg %p84
        %p256 = pneg %p81
        %p257 = pneg %p105
        %p258 = pneg %p102
        %p259 = pneg %p126
        %p260 = pneg %p123
        %p261 = pneg %p147
        %p262 = pneg %p144
        %p263 = pneg %p168
        %p264 = pneg %p165
        %p265 = pneg %p194
        %p266 = pneg %p191
        %s267 = sand.u32 %s181, 1
        %s268 = scalar_lea.sflag [#allocation3], %s267
        %s269 = sand.u32 %s181, 1
        %s270 = smul.addr %s269, 8
        %s271 = scalar_lea.vmem [#allocation2], %s270
        %p272 = scmp.lt.s32.totalorder %s21, 1
        %s273 = scalar_select %p272, %s21, 1
        %s274 = smul.addr %s273, 2
        %s275 = smul.addr %s274, 4
        %s276 = scalar_lea.vmem %s0, %s275
        %v277 = vld [vmem:[%s276] sm:$0xff]
        %v278 = vld [vmem:[%s1] sm:$0xff]
        %v279 = vld [vmem:[%s2] sm:$0xff]
        %281 = vset.pattern.permute.xlu0 0
        %282 = vperm.xlu0 %281, %v279
        %v283 = vpop.permute.xlu0 %282
        %286 = vst [vmem:[#allocation1] ss:$2 sm:$0xff] %v277
        %v287 = vld.sshfl [vmem:[#allocation1] sm:$0xff pattern:$0x75316420]
        %v288 = vld.sshfl [vmem:[#allocation1 + $0x8] sm:$0xff pattern:$0x75316420]
        %vm289 = vcmask 31744
        %v291 = vsel %vm289, %v278, 0
        %vm293 = vcmask 1043456
        %v294 = vsel %vm293, %v287, 0
        %v296 = vsel %vm293, %v288, 0
        %298 = vmatpush.msra.mxu0 0.0
        %299 = vmatpush.msra.mxu0 0.0
        %300 = vmatpush.msra.mxu0 0.0
        %301 = vmatpush.msra.mxu0 0.0
        %302 = vmatpush.msra.mxu0 0.0
        %303 = vmatpush.msra.mxu0 0.0
        %304 = vmatpush.msra.mxu0 0.0
        %305 = vmatpush.msra.mxu0 0.0
        %306 = vmatpush.msra.mxu0 0.0
        %307 = vmatpush.msra.mxu0 0.0
        %308 = vmatpush.msra.mxu0 0.0
        %309 = vmatpush.msra.mxu0 0.0
        %310 = vmatpush.msra.mxu0 0.0
        %311 = vmatpush.msra.mxu0 0.0
        %312 = vmatpush.msra.mxu0 0.0
        %313 = vmatpush.msra.mxu0 %v294
        %314 = vmatmul.f32.gmra.mxu0 %v291
        %v315 = vpop.f32.mrf.mxu0
        %v316 = vadd.f32 %v283, %v315
        %317 = vdwg.mxu0
        %318 = vmatpush.msra.mxu0 0.0
        %319 = vmatpush.msra.mxu0 0.0
        %320 = vmatpush.msra.mxu0 0.0
        %321 = vmatpush.msra.mxu0 0.0
        %322 = vmatpush.msra.mxu0 0.0
        %323 = vmatpush.msra.mxu0 0.0
        %324 = vmatpush.msra.mxu0 0.0
        %325 = vmatpush.msra.mxu0 0.0
        %326 = vmatpush.msra.mxu0 0.0
        %327 = vmatpush.msra.mxu0 0.0
        %328 = vmatpush.msra.mxu0 0.0
        %329 = vmatpush.msra.mxu0 0.0
        %330 = vmatpush.msra.mxu0 0.0
        %331 = vmatpush.msra.mxu0 0.0
        %332 = vmatpush.msra.mxu0 0.0
        %333 = vmatpush.msra.mxu0 %v296
        %334 = vmatmul.f32.gmra.mxu0 %v291
        %v335 = vpop.f32.mrf.mxu0
        %v336 = vadd.f32 %v283, %v335
        %337 = vdwg.mxu0
        %v338 = vmax.f32 %v316, 0.0
        %v339 = vmax.f32 %v336, 0.0
        %v340 = vmin.f32 %v338, 6.0
        %v341 = vmin.f32 %v339, 6.0
        %v342 = vlaneseq
        %v343 = vand.u32 %v342, 127
        %v344 = vadd.s32 %v343, 128
        %vm345 = vcmp.lt.s32.totalorder %v343, 0
        %v346 = vsub.s32 0, %v343
        %v347 = vsel %vm345, %v346, %v343
        %v348 = vshrl.u32 %v347, 4
        %v349 = vand.u32 %v347, 15
        %v350 = vsub.s32 0, %v349
        %v351 = vsel %vm345, %v350, %v349
        %vm352 = vcmp.lt.s32.totalorder %v344, 0
        %v353 = vsub.s32 0, %v344
        %v354 = vsel %vm352, %v353, %v344
        %v355 = vshrl.u32 %v354, 4
        %v356 = vand.u32 %v354, 15
        %v357 = vsub.s32 0, %v356
        %v358 = vsel %vm352, %v357, %v356
        %vm359 = vcmp.ne.s32.totalorder %v351, 0
        %vm360 = vcmp.ne.s32.totalorder %v358, 0
        %vm361 = vcmp.lt.s32.totalorder %v351, 0
        %vm362 = vcmp.lt.s32.totalorder %v358, 0
        %vm363 = vmand %vm361, %vm359
        %vm364 = vmand %vm362, %vm360
        %v365 = vadd.s32 %v351, 16
        %v366 = vadd.s32 %v358, 16
        %v367 = vsel %vm363, %v365, %v351
        %v368 = vsel %vm364, %v366, %v358
        %vm369 = vcmp.ge.s32.totalorder %v343, 16
        %vm370 = vcmp.ge.s32.totalorder %v344, 16
        %vm371 = vcmp.lt.s32.totalorder %v343, 240
        %vm372 = vcmp.lt.s32.totalorder %v344, 240
        %vm373 = vcmp.ne.s32.totalorder %v367, 0
        %vm374 = vcmp.ne.s32.totalorder %v368, 0
        %vm375 = vcmp.ne.s32.totalorder %v367, 15
        %vm376 = vcmp.ne.s32.totalorder %v368, 15
        %s377 = scalar_lea.vmem %s3, 32
        %v378 = vld [vmem:[%s377] sm:$0xff]
        %380 = vset.pattern.permute.xlu0 0
        %381 = vperm.xlu0 %380, %v378
        %v382 = vpop.permute.xlu0 %381
        %v384 = vmul.f32 %v340, %v382
        %v385 = vmul.f32 %v341, %v382
        %386 = vrot.lane.b32.xlu0 %v340, 17
        %v387 = vpop.permute.xlu0 %386
        %388 = vrot.lane.b32.xlu0 %v341, 17
        %v389 = vpop.permute.xlu0 %388
        %vm390 = vcmp.lt.s32.totalorder %v343, 17
        %v391 = vsel %vm390, %v387, %v389
        %v392 = vsel %vm390, %v389, %v387
        %vm393 = vmand %vm369, %vm373
        %vm394 = vmand %vm370, %vm374
        %v395 = vsel %vm393, 1, 0
        %v396 = vsel %vm394, 1, 0
        %vm397 = vcmp.eq.s32.totalorder %v395, 1
        %vm398 = vcmp.eq.s32.totalorder %v396, 1
        %v399 = vsel %vm397, %v392, 0.0
        %v400 = vsel %vm398, %v391, 0.0
        %v401 = vld [vmem:[%s3] sm:$0xff]
        %403 = vset.pattern.permute.xlu0 0
        %404 = vperm.xlu0 %403, %v401
        %v405 = vpop.permute.xlu0 %404
        %v407 = vmul.f32 %v399, %v405
        %v408 = vmul.f32 %v400, %v405
        %v409 = vadd.f32 %v384, %v407
        %v410 = vadd.f32 %v385, %v408
        %411 = vrot.lane.b32.xlu0 %v340, 16
        %v412 = vpop.permute.xlu0 %411
        %413 = vrot.lane.b32.xlu0 %v341, 16
        %v414 = vpop.permute.xlu0 %413
        %vm415 = vcmp.lt.s32.totalorder %v343, 16
        %v416 = vsel %vm415, %v412, %v414
        %v417 = vsel %vm415, %v414, %v412
        %v418 = vsel %vm369, 1, 0
        %v419 = vsel %vm370, 1, 0
        %vm420 = vcmp.eq.s32.totalorder %v418, 1
        %vm421 = vcmp.eq.s32.totalorder %v419, 1
        %v422 = vsel %vm420, %v417, 0.0
        %v423 = vsel %vm421, %v416, 0.0
        %s424 = scalar_lea.vmem %s3, 8
        %v425 = vld [vmem:[%s424] sm:$0xff]
        %427 = vset.pattern.permute.xlu0 0
        %428 = vperm.xlu0 %427, %v425
        %v429 = vpop.permute.xlu0 %428
        %v431 = vmul.f32 %v422, %v429
        %v432 = vmul.f32 %v423, %v429
        %v433 = vadd.f32 %v409, %v431
        %v434 = vadd.f32 %v410, %v432
        %435 = vrot.lane.b32.xlu0 %v340, 15
        %v436 = vpop.permute.xlu0 %435
        %437 = vrot.lane.b32.xlu0 %v341, 15
        %v438 = vpop.permute.xlu0 %437
        %vm439 = vcmp.lt.s32.totalorder %v343, 15
        %v440 = vsel %vm439, %v436, %v438
        %v441 = vsel %vm439, %v438, %v436
        %vm442 = vmand %vm369, %vm375
        %vm443 = vmand %vm370, %vm376
        %v444 = vsel %vm442, 1, 0
        %v445 = vsel %vm443, 1, 0
        %vm446 = vcmp.eq.s32.totalorder %v444, 1
        %vm447 = vcmp.eq.s32.totalorder %v445, 1
        %v448 = vsel %vm446, %v441, 0.0
        %v449 = vsel %vm447, %v440, 0.0
        %s450 = scalar_lea.vmem %s3, 16
        %v451 = vld [vmem:[%s450] sm:$0xff]
        %453 = vset.pattern.permute.xlu0 0
        %454 = vperm.xlu0 %453, %v451
        %v455 = vpop.permute.xlu0 %454
        %v457 = vmul.f32 %v448, %v455
        %v458 = vmul.f32 %v449, %v455
        %v459 = vadd.f32 %v433, %v457
        %v460 = vadd.f32 %v434, %v458
        %461 = vrot.lane.b32.xlu0 %v340, 1
        %v462 = vpop.permute.xlu0 %461
        %463 = vrot.lane.b32.xlu0 %v341, 1
        %v464 = vpop.permute.xlu0 %463
        %vm465 = vcmp.lt.s32.totalorder %v343, 1
        %v466 = vsel %vm465, %v462, %v464
        %v467 = vsel %vm465, %v464, %v462
        %v468 = vsel %vm373, 1, 0
        %v469 = vsel %vm374, 1, 0
        %vm470 = vcmp.eq.s32.totalorder %v468, 1
        %vm471 = vcmp.eq.s32.totalorder %v469, 1
        %v472 = vsel %vm470, %v467, 0.0
        %v473 = vsel %vm471, %v466, 0.0
        %s474 = scalar_lea.vmem %s3, 24
        %v475 = vld [vmem:[%s474] sm:$0xff]
        %477 = vset.pattern.permute.xlu0 0
        %478 = vperm.xlu0 %477, %v475
        %v479 = vpop.permute.xlu0 %478
        %v481 = vmul.f32 %v472, %v479
        %v482 = vmul.f32 %v473, %v479
        %v483 = vadd.f32 %v459, %v481
        %v484 = vadd.f32 %v460, %v482
        %485 = vrot.lane.b32.xlu0 %v340, 127
        %v486 = vpop.permute.xlu0 %485
        %487 = vrot.lane.b32.xlu0 %v341, 127
        %v488 = vpop.permute.xlu0 %487
        %vm489 = vcmp.lt.s32.totalorder %v343, 127
        %v490 = vsel %vm489, %v486, %v488
        %v491 = vsel %vm489, %v488, %v486
        %v492 = vsel %vm375, 1, 0
        %v493 = vsel %vm376, 1, 0
        %vm494 = vcmp.eq.s32.totalorder %v492, 1
        %vm495 = vcmp.eq.s32.totalorder %v493, 1
        %v496 = vsel %vm494, %v490, 0.0
        %v497 = vsel %vm495, %v491, 0.0
        %s498 = scalar_lea.vmem %s3, 40
        %v499 = vld [vmem:[%s498] sm:$0xff]
        %501 = vset.pattern.permute.xlu0 0
        %502 = vperm.xlu0 %501, %v499
        %v503 = vpop.permute.xlu0 %502
        %v505 = vmul.f32 %v496, %v503
        %v506 = vmul.f32 %v497, %v503
        %v507 = vadd.f32 %v483, %v505
        %v508 = vadd.f32 %v484, %v506
        %509 = vrot.lane.b32.xlu0 %v340, 113
        %v510 = vpop.permute.xlu0 %509
        %511 = vrot.lane.b32.xlu0 %v341, 113
        %v512 = vpop.permute.xlu0 %511
        %vm513 = vcmp.lt.s32.totalorder %v343, 113
        %v514 = vsel %vm513, %v510, %v512
        %v515 = vsel %vm513, %v512, %v510
        %vm516 = vmand %vm371, %vm373
        %vm517 = vmand %vm372, %vm374
        %v518 = vsel %vm516, 1, 0
        %v519 = vsel %vm517, 1, 0
        %vm520 = vcmp.eq.s32.totalorder %v518, 1
        %vm521 = vcmp.eq.s32.totalorder %v519, 1
        %v522 = vsel %vm520, %v514, 0.0
        %v523 = vsel %vm521, %v515, 0.0
        %s524 = scalar_lea.vmem %s3, 48
        %v525 = vld [vmem:[%s524] sm:$0xff]
        %527 = vset.pattern.permute.xlu0 0
        %528 = vperm.xlu0 %527, %v525
        %v529 = vpop.permute.xlu0 %528
        %v531 = vmul.f32 %v522, %v529
        %v532 = vmul.f32 %v523, %v529
        %v533 = vadd.f32 %v507, %v531
        %v534 = vadd.f32 %v508, %v532
        %535 = vrot.lane.b32.xlu0 %v340, 112
        %v536 = vpop.permute.xlu0 %535
        %537 = vrot.lane.b32.xlu0 %v341, 112
        %v538 = vpop.permute.xlu0 %537
        %vm539 = vcmp.lt.s32.totalorder %v343, 112
        %v540 = vsel %vm539, %v536, %v538
        %v541 = vsel %vm539, %v538, %v536
        %v542 = vsel %vm371, 1, 0
        %v543 = vsel %vm372, 1, 0
        %vm544 = vcmp.eq.s32.totalorder %v542, 1
        %vm545 = vcmp.eq.s32.totalorder %v543, 1
        %v546 = vsel %vm544, %v540, 0.0
        %v547 = vsel %vm545, %v541, 0.0
        %s548 = scalar_lea.vmem %s3, 56
        %v549 = vld [vmem:[%s548] sm:$0xff]
        %551 = vset.pattern.permute.xlu0 0
        %552 = vperm.xlu0 %551, %v549
        %v553 = vpop.permute.xlu0 %552
        %v555 = vmul.f32 %v546, %v553
        %v556 = vmul.f32 %v547, %v553
        %v557 = vadd.f32 %v533, %v555
        %v558 = vadd.f32 %v534, %v556
        %559 = vrot.lane.b32.xlu0 %v340, 111
        %v560 = vpop.permute.xlu0 %559
        %561 = vrot.lane.b32.xlu0 %v341, 111
        %v562 = vpop.permute.xlu0 %561
        %vm563 = vcmp.lt.s32.totalorder %v343, 111
        %v564 = vsel %vm563, %v560, %v562
        %v565 = vsel %vm563, %v562, %v560
        %vm566 = vmand %vm371, %vm375
        %vm567 = vmand %vm372, %vm376
        %v568 = vsel %vm566, 1, 0
        %v569 = vsel %vm567, 1, 0
        %vm570 = vcmp.eq.s32.totalorder %v568, 1
        %vm571 = vcmp.eq.s32.totalorder %v569, 1
        %v572 = vsel %vm570, %v564, 0.0
        %v573 = vsel %vm571, %v565, 0.0
        %s574 = scalar_lea.vmem %s3, 64
        %v575 = vld [vmem:[%s574] sm:$0xff]
        %577 = vset.pattern.permute.xlu0 0
        %578 = vperm.xlu0 %577, %v575
        %v579 = vpop.permute.xlu0 %578
        %v581 = vmul.f32 %v572, %v579
        %v582 = vmul.f32 %v573, %v579
        %v583 = vadd.f32 %v557, %v581
        %v584 = vadd.f32 %v558, %v582
        %v585 = vld [vmem:[%s4] sm:$0xff]
        %587 = vset.pattern.permute.xlu0 0
        %588 = vperm.xlu0 %587, %v585
        %v589 = vpop.permute.xlu0 %588
        %v591 = vadd.f32 %v583, %v589
        %v592 = vadd.f32 %v584, %v589
        %v593 = vmax.f32 %v591, 0.0
        %v594 = vmax.f32 %v592, 0.0
        %v595 = vmin.f32 %v593, 6.0
        %v596 = vmin.f32 %v594, 6.0
        %v597 = vld [vmem:[%s5] sm:$0xf]
        %v598 = vld [vmem:[%s6] sm:$0xf]
        %600 = vset.pattern.permute.xlu0 0
        %601 = vperm.xlu0 %600, %v598
        %v602 = vpop.permute.xlu0 %601
        %vm604 = vcmask 64512
        %v606 = vsel %vm604, %v597, 0
        %608 = vmatpush.msra.mxu0 0.0
        %609 = vmatpush.msra.mxu0 0.0
        %610 = vmatpush.msra.mxu0 0.0
        %611 = vmatpush.msra.mxu0 0.0
        %612 = vmatpush.msra.mxu0 0.0
        %613 = vmatpush.msra.mxu0 0.0
        %614 = vmatpush.msra.mxu0 0.0
        %615 = vmatpush.msra.mxu0 0.0
        %616 = vmatpush.msra.mxu0 0.0
        %617 = vmatpush.msra.mxu0 0.0
        %618 = vmatpush.msra.mxu0 0.0
        %619 = vmatpush.msra.mxu0 0.0
        %620 = vmatpush.msra.mxu0 0.0
        %621 = vmatpush.msra.mxu0 0.0
        %622 = vmatpush.msra.mxu0 0.0
        %623 = vmatpush.msra.mxu0 %v595
        %624 = vmatmul.f32.gmra.mxu0 %v606
        %v625 = vpop.f32.mrf.mxu0
        %v626 = vadd.f32 %v602, %v625
        %627 = vdwg.mxu0
        %628 = vmatpush.msra.mxu0 0.0
        %629 = vmatpush.msra.mxu0 0.0
        %630 = vmatpush.msra.mxu0 0.0
        %631 = vmatpush.msra.mxu0 0.0
        %632 = vmatpush.msra.mxu0 0.0
        %633 = vmatpush.msra.mxu0 0.0
        %634 = vmatpush.msra.mxu0 0.0
        %635 = vmatpush.msra.mxu0 0.0
        %636 = vmatpush.msra.mxu0 0.0
        %637 = vmatpush.msra.mxu0 0.0
        %638 = vmatpush.msra.mxu0 0.0
        %639 = vmatpush.msra.mxu0 0.0
        %640 = vmatpush.msra.mxu0 0.0
        %641 = vmatpush.msra.mxu0 0.0
        %642 = vmatpush.msra.mxu0 0.0
        %643 = vmatpush.msra.mxu0 %v596
        %644 = vmatmul.f32.gmra.mxu0 %v606
        %v645 = vpop.f32.mrf.mxu0
        %v646 = vadd.f32 %v602, %v645
        %647 = vdwg.mxu0
        %648 = vst [vmem:[#allocation1] ss:$2 sm:$0xff] %v277
        %v649 = vld.sshfl [vmem:[#allocation1] sm:$0xff pattern:$0x75316420]
        %v650 = vld.sshfl [vmem:[#allocation1 + $0x8] sm:$0xff pattern:$0x75316420]
        %v653 = vadd.f32 %v626, %v649
        %v654 = vadd.f32 %v646, %v650
        %v657 = vrot.slane %v654, 4
        %v658 = vsel %vm293, %v653, %v657
        %660 = vst [vmem:[%s271] sm:$0xff] %v658
        %s661 = sand.u32 %s181, 1
        %s662 = scalar_lea.sflag [#allocation3], %s661
        %s663 = sand.u32 %s181, 1
        %s664 = smul.addr %s663, 8
        %s665 = scalar_lea.vmem [#allocation2], %s664
        // Predicated region
        $region49: #{tpu_custom_call.1} parent=47 // pred_check
          %p666 = pneg %p191
        $region50: #{tpu_custom_call.1} parent=47 // pred_check_branch
          %668 = sbr.rel (%p666) target = $region52
        $region51: #{tpu_custom_call.1} parent=47 // pred_region
          %670 = vsyncadd %s662, 0
          %s671 = smul.addr %s21, 2
          %s672 = smul.addr %s671, 4
          %s673 = scalar_lea.hbm %s7, %s672
          %s675 = sshll.u32 %s665, 4
          %s676 = int_to_ptr.vmem [resolvable:$true] %s675
          %s677 = sshll.u32 %s673, 4
          %s678 = int_to_ptr.hbm [resolvable:$true] %s677
          %680 = dma.vmem_to_hbm [thread:$0]  %s676, 128, %s678, %s662
        $region52: #{tpu_custom_call.1} parent=47 // pred_fallthru
          _
      $region48: #{tpu_custom_call.1} parent=5 // pred_fallthru
        _
      %p681 = scmp.le.s32.totalorder 2, %s16
      // Predicated region
      $region53: #{tpu_custom_call.1} parent=5 // pred_check
        %p682 = pneg %p681
      $region54: #{tpu_custom_call.1} parent=5 // pred_check_branch
        %684 = sbr.rel (%p682) target = $region56
      $region55: #{tpu_custom_call.1} parent=5 // pred_region
        %s685 = ssub.s32 %s16, 2
        // Predicated region
        $region57: #{tpu_custom_call.1} parent=55 // pred_check
          %p686 = pneg %p197
        $region58: #{tpu_custom_call.1} parent=55 // pred_check_branch
          %688 = sbr.rel (%p686) target = $region60
        $region59: #{tpu_custom_call.1} parent=55 // pred_region
          %s689 = sand.u32 %s182, 1
          %s690 = scalar_lea.sflag [#allocation3], %s689
          %s691 = sand.u32 %s182, 1
          %s692 = smul.addr %s691, 8
          %s693 = scalar_lea.vmem [#allocation2], %s692
          %695 = dma.done %s690, 128
        $region60: #{tpu_custom_call.1} parent=55 // pred_fallthru
          _
      $region56: #{tpu_custom_call.1} parent=5 // pred_fallthru
        _
    $region6: #{tpu_custom_call.1} parent=1 // loop_footer
      %s20 = sadd.s32 1, %s16
    $region7: #{tpu_custom_call.1} parent=1 // loop_footer_branch
      %15 = sbr.rel target = $region3
    $region8: #{tpu_custom_call.1} parent=1 // loop_exit
      _
    %696 = vsyncpa [#allocation3], 1
    %s697 = scalar_lea.sflag [#allocation3], 1
    %698 = vsyncpa %s697, 1

</llo_original>
